<compile_context>
chip_gen: v5e
topology: v5e:2x2
jax: 0.10.0
libtpu: 0.0.40
codegen_flags: <defaults>
</compile_context>

<pallas_src>
import math
import jax
import jax.numpy as jnp
from jax.experimental import pallas as pl
from jax.experimental.pallas import tpu as pltpu


_SQRT1_2 = 0.7071067811865476


def _round_up(x, m):
    return ((x + m - 1) // m) * m


def _gelu_exact(x):
    # PyTorch nn.GELU() default = exact erf formulation (evaluated in f32).
    return 0.5 * x * (1.0 + jax.lax.erf(x * _SQRT1_2))


def dynamics_kernel(z_ref, a_ref, w_z_ref, w_a_ref, b_in_ref,
                    wb_ref, bb_ref, ln_ref, w_out_ref, b_out_ref, o_ref):
    """Full forward pass for one batch tile.

    z_ref    : (TB, E)           current latent tile
    a_ref    : (TB, A)           action tile
    w_z_ref  : (E, H)   bf16     input_proj weight, latent half
    w_a_ref  : (A, H)   bf16     input_proj weight, action half
    b_in_ref : (1, H)   f32      input_proj bias
    wb_ref   : (NB,2,H,H) bf16   residual-block linear weights
    bb_ref   : (NB,2,H) f32      residual-block linear biases
    ln_ref   : (NB,2,H) f32      layernorm [gamma, beta] per block
    w_out_ref: (H, Ep)  bf16     output_proj weight (zero-padded to lane-dense Ep)
    b_out_ref: (1, Ep)  f32      output_proj bias (zero-padded)
    o_ref    : (TB, Ep)          predicted next latent (padded; wrapper slices)
    """
    cdt = w_z_ref.dtype  # MXU operand dtype (bf16)

    # input projection on un-concatenated halves: z@Wz + a@Wa + b  (f32 accumulation)
    h = (jnp.dot(z_ref[...].astype(cdt), w_z_ref[...],
                 preferred_element_type=jnp.float32)
         + jnp.dot(a_ref[...].astype(cdt), w_a_ref[...],
                   preferred_element_type=jnp.float32)
         + b_in_ref[...])
    h = _gelu_exact(h)

    num_blocks = wb_ref.shape[0]

    def block_step(i, h):
        # i may be a python int (static unroll) or a traced index (fori_loop)
        wb_i = wb_ref[i]           # (2, H, H)
        bb_i = bb_ref[i]           # (2, H)
        ln_i = ln_ref[i]           # (2, H)
        residual = h
        t = jnp.dot(h.astype(cdt), wb_i[0],
                    preferred_element_type=jnp.float32) + bb_i[0:1, :]
        t = _gelu_exact(t)
        t = jnp.dot(t.astype(cdt), wb_i[1],
                    preferred_element_type=jnp.float32) + bb_i[1:2, :]
        t = _gelu_exact(t)
        # residual add + LayerNorm in f32 (biased variance, eps=1e-5 = PyTorch default)
        h = t + residual
        mean = jnp.mean(h, axis=-1, keepdims=True)
        var = jnp.mean(jnp.square(h - mean), axis=-1, keepdims=True)
        h = (h - mean) * jax.lax.rsqrt(var + 1e-5)
        return h * ln_i[0:1, :] + ln_i[1:2, :]

    if num_blocks <= 4:
        for i in range(num_blocks):          # static unroll for shallow configs
            h = block_step(i, h)
    else:
        h = jax.lax.fori_loop(0, num_blocks, block_step, h)

    # output projection (lane-dense padded output columns are exact zeros)
    z_next = jnp.dot(h.astype(cdt), w_out_ref[...],
                     preferred_element_type=jnp.float32) + b_out_ref[...]
    o_ref[...] = z_next.astype(o_ref.dtype)


def init_params(key, encoding_dim, action_dim, hidden_dim, num_layers,
                param_dtype=jnp.bfloat16):
    """Matches DynamicsModel._init_weights:
      Linear: kaiming_normal_(mode='fan_out', nonlinearity='relu') -> N(0, 2/out), bias=0
      LayerNorm: gamma=1, beta=0
    Weights stored [in, out] (kernel computes x @ W) and cast to `param_dtype`
    (bf16 -> native MXU operand dtype). Biases / LN params stay f32.
    input_proj is split into the latent/action halves; output_proj is zero-padded
    along its output axis to a multiple of 128 lanes (lane-dense stores)."""
    num_blocks = (num_layers - 2) // 2
    keys = jax.random.split(key, 3 + 2 * num_blocks)

    def kaiming(k, fan_in, fan_out):
        std = math.sqrt(2.0 / fan_out)
        return (jax.random.normal(k, (fan_in, fan_out), jnp.float32) * std).astype(param_dtype)

    w_z = kaiming(keys[0], encoding_dim, hidden_dim)
    w_a = kaiming(keys[1], action_dim, hidden_dim)
    b_in = jnp.zeros((1, hidden_dim), jnp.float32)

    wb, bb, ln = [], [], []
    for i in range(num_blocks):
        w1 = kaiming(keys[3 + 2 * i], hidden_dim, hidden_dim)
        w2 = kaiming(keys[4 + 2 * i], hidden_dim, hidden_dim)
        wb.append(jnp.stack([w1, w2], axis=0))
        bb.append(jnp.zeros((2, hidden_dim), jnp.float32))
        ln.append(jnp.stack([jnp.ones((hidden_dim,), jnp.float32),
                             jnp.zeros((hidden_dim,), jnp.float32)], axis=0))
    wb = jnp.stack(wb, axis=0)    # (NB, 2, H, H)
    bb = jnp.stack(bb, axis=0)    # (NB, 2, H)
    ln = jnp.stack(ln, axis=0)    # (NB, 2, H)

    enc_pad = _round_up(max(encoding_dim, 128), 128)
    w_out = kaiming(keys[2], hidden_dim, encoding_dim)
    w_out = jnp.pad(w_out, ((0, 0), (0, enc_pad - encoding_dim)))
    b_out = jnp.zeros((1, enc_pad), jnp.float32)

    return dict(w_z=w_z, w_a=w_a, b_in=b_in, wb=wb, bb=bb, ln=ln,
                w_out=w_out, b_out=b_out)


def dynamics_model_forward(z_t, a_t, params, *, block_batch=512):
    """Pallas-backed forward pass of DynamicsModel."""
    if a_t.dtype != z_t.dtype:
        a_t = a_t.astype(z_t.dtype)

    batch, enc = z_t.shape
    act_dim = a_t.shape[1]
    w_z, w_a = params["w_z"], params["w_a"]
    b_in, wb, bb, ln = params["b_in"], params["wb"], params["bb"], params["ln"]
    w_out, b_out = params["w_out"], params["b_out"]
    enc_pad = w_out.shape[1]

    # --- batch tiling -------------------------------------------------------
    # Balanced, sublane-aligned tiles capped by block_batch. Force >= 2 (even)
    # grid steps when the batch allows it so the "parallel" axis shards across
    # both v7x TensorCores; keeps padded-batch waste small for ragged batches.
    num_tiles = max(pl.cdiv(batch, block_batch), 1)
    if batch >= 16:
        num_tiles = max(num_tiles, 2)
    if num_tiles > 2 and num_tiles % 2:
        num_tiles += 1
    tb = _round_up(pl.cdiv(batch, num_tiles), 8)
    b_pad = num_tiles * tb

    if b_pad != batch:
        pad = b_pad - batch
        z_t = jnp.pad(z_t, ((0, pad), (0, 0)))
        a_t = jnp.pad(a_t, ((0, pad), (0, 0)))

    grid = (num_tiles,)

    def tile_spec(feat):
        # Pipelined (double-buffered) activation tile.
        return pl.BlockSpec((tb, feat), lambda i: (i, 0))

    def resident(shape):
        # Whole-array block whose index never changes -> DMA'd once, stays
        # VMEM-resident. Single buffer (Buffered(1)): re-DMA never happens, so a
        # second buffer would only double the weight VMEM footprint.
        n = len(shape)
        return pl.BlockSpec(shape, lambda i, _n=n: (0,) * _n,
                            pipeline_mode=pl.Buffered(1))

    # --- VMEM budget --------------------------------------------------------
    # Single-buffered weights + double-buffered activation tiles (in + out)
    # + ~4 MiB Mosaic scratch / sublane-padding headroom; cap at 56 MiB so we
    # always fit under v7x's 64 MiB per-TC physical VMEM.
    weight_bytes = sum(int(x.size) * x.dtype.itemsize
                       for x in (w_z, w_a, b_in, wb, bb, ln, w_out, b_out))
    act_tile_bytes = tb * (enc + act_dim + enc_pad) * z_t.dtype.itemsize
    vmem_limit = int(min(weight_bytes + 2 * act_tile_bytes + (4 << 20), 56 << 20))

    out = pl.pallas_call(
        dynamics_kernel,
        out_shape=jax.ShapeDtypeStruct((b_pad, enc_pad), z_t.dtype),
        grid=grid,
        in_specs=[
            tile_spec(enc), tile_spec(act_dim),
            resident(w_z.shape), resident(w_a.shape), resident(b_in.shape),
            resident(wb.shape), resident(bb.shape), resident(ln.shape),
            resident(w_out.shape), resident(b_out.shape),
        ],
        out_specs=tile_spec(enc_pad),
        compiler_params=pltpu.CompilerParams(
            dimension_semantics=("parallel",),
            vmem_limit_bytes=vmem_limit),
    )(z_t, a_t, w_z, w_a, b_in, wb, bb, ln, w_out, b_out)

    return out[:batch, :enc]


if __name__ == "__main__":
    # Small, forward-consistent shapes.
    batch = 8
    encoding_dim = 32
    action_dim = 2
    hidden_dim = 128
    num_layers = 6          # -> 2 residual blocks

    key = jax.random.PRNGKey(0)
    k_param, k_z, k_a = jax.random.split(key, 3)

    params = init_params(k_param, encoding_dim, action_dim, hidden_dim, num_layers)

    z_t = jax.random.normal(k_z, (batch, encoding_dim), jnp.float32)
    a_t = jax.random.normal(k_a, (batch, action_dim), jnp.float32)

    z_next = dynamics_model_forward(z_t, a_t, params)
    jax.block_until_ready(z_next)

    assert z_next.shape == (batch, encoding_dim)
    assert z_next.dtype == z_t.dtype
    print("KERNEL_OK")
</pallas_src>

<mosaic_0001>
module attributes {stable_mosaic.version = 11 : i64} {
  func.func @dynamics_kernel(%arg0: i32, %arg1: memref<8x32xf32, #tpu.memory_space<vmem>>, %arg2: memref<8x2xf32, #tpu.memory_space<vmem>>, %arg3: memref<32x128xbf16, #tpu.memory_space<vmem>>, %arg4: memref<2x128xbf16, #tpu.memory_space<vmem>>, %arg5: memref<1x128xf32, #tpu.memory_space<vmem>>, %arg6: memref<2x2x128x128xbf16, #tpu.memory_space<vmem>>, %arg7: memref<2x2x128xf32, #tpu.memory_space<vmem>>, %arg8: memref<2x2x128xf32, #tpu.memory_space<vmem>>, %arg9: memref<128x128xbf16, #tpu.memory_space<vmem>>, %arg10: memref<1x128xf32, #tpu.memory_space<vmem>>, %arg11: memref<8x128xf32, #tpu.memory_space<vmem>>) attributes {dimension_semantics = [#tpu.dimension_semantics<parallel>], iteration_bounds = array<i64: 1>, scalar_prefetch = 0 : i64, scratch_operands = 0 : i64, tpu.core_type = #tpu.core_type<tc>, window_params = [{transform_indices = @transform_0, window_bounds = array<i64: 8, 32>}, {transform_indices = @transform_1, window_bounds = array<i64: 8, 2>}, {pipeline_mode = #tpu.pipeline_mode<synchronous>, transform_indices = @transform_2, window_bounds = array<i64: 32, 128>}, {pipeline_mode = #tpu.pipeline_mode<synchronous>, transform_indices = @transform_3, window_bounds = array<i64: 2, 128>}, {pipeline_mode = #tpu.pipeline_mode<synchronous>, transform_indices = @transform_4, window_bounds = array<i64: 1, 128>}, {pipeline_mode = #tpu.pipeline_mode<synchronous>, transform_indices = @transform_5, window_bounds = array<i64: 2, 2, 128, 128>}, {pipeline_mode = #tpu.pipeline_mode<synchronous>, transform_indices = @transform_6, window_bounds = array<i64: 2, 2, 128>}, {pipeline_mode = #tpu.pipeline_mode<synchronous>, transform_indices = @transform_7, window_bounds = array<i64: 2, 2, 128>}, {pipeline_mode = #tpu.pipeline_mode<synchronous>, transform_indices = @transform_8, window_bounds = array<i64: 128, 128>}, {pipeline_mode = #tpu.pipeline_mode<synchronous>, transform_indices = @transform_9, window_bounds = array<i64: 1, 128>}, {transform_indices = @transform_10, window_bounds = array<i64: 8, 128>}]} {
    %c0 = arith.constant 0 : index
    %c0_0 = arith.constant 0 : index
    %0 = vector.load %arg1[%c0, %c0_0] : memref<8x32xf32, #tpu.memory_space<vmem>>, vector<8x32xf32>
    %1 = arith.truncf %0 : vector<8x32xf32> to vector<8x32xbf16>
    %c0_1 = arith.constant 0 : index
    %c0_2 = arith.constant 0 : index
    %2 = vector.load %arg3[%c0_1, %c0_2] : memref<32x128xbf16, #tpu.memory_space<vmem>>, vector<32x128xbf16>
    %cst = arith.constant dense<0.000000e+00> : vector<8x128xf32>
    %3 = tpu.matmul %1, %2, %cst {dimension_numbers = #tpu.dot_dimension_numbers<[1], [0], [0], [1], [0, 0, 1, 1], [], []>} : vector<8x32xbf16>, vector<32x128xbf16>, vector<8x128xf32> -> vector<8x128xf32>
    %c0_3 = arith.constant 0 : index
    %c0_4 = arith.constant 0 : index
    %4 = vector.load %arg2[%c0_3, %c0_4] : memref<8x2xf32, #tpu.memory_space<vmem>>, vector<8x2xf32>
    %5 = arith.truncf %4 : vector<8x2xf32> to vector<8x2xbf16>
    %c0_5 = arith.constant 0 : index
    %c0_6 = arith.constant 0 : index
    %6 = vector.load %arg4[%c0_5, %c0_6] : memref<2x128xbf16, #tpu.memory_space<vmem>>, vector<2x128xbf16>
    %cst_7 = arith.constant dense<0.000000e+00> : vector<8x128xf32>
    %7 = tpu.matmul %5, %6, %cst_7 {dimension_numbers = #tpu.dot_dimension_numbers<[1], [0], [0], [1], [0, 0, 1, 1], [], []>} : vector<8x2xbf16>, vector<2x128xbf16>, vector<8x128xf32> -> vector<8x128xf32>
    %8 = arith.addf %3, %7 : vector<8x128xf32>
    %c0_8 = arith.constant 0 : index
    %c0_9 = arith.constant 0 : index
    %9 = vector.load %arg5[%c0_8, %c0_9] : memref<1x128xf32, #tpu.memory_space<vmem>>, vector<1x128xf32>
    %10 = vector.broadcast %9 : vector<1x128xf32> to vector<8x128xf32>
    %11 = arith.addf %8, %10 : vector<8x128xf32>
    %cst_10 = arith.constant 5.000000e-01 : f32
    %12 = vector.broadcast %cst_10 : f32 to vector<8x128xf32>
    %13 = arith.mulf %12, %11 : vector<8x128xf32>
    %cst_11 = arith.constant 0.707106769 : f32
    %14 = vector.broadcast %cst_11 : f32 to vector<8x128xf32>
    %15 = arith.mulf %11, %14 : vector<8x128xf32>
    %16 = math.erf %15 : vector<8x128xf32>
    %cst_12 = arith.constant 1.000000e+00 : f32
    %17 = vector.broadcast %cst_12 : f32 to vector<8x128xf32>
    %18 = arith.addf %17, %16 : vector<8x128xf32>
    %19 = arith.mulf %13, %18 : vector<8x128xf32>
    %c0_13 = arith.constant 0 : index
    %c0_14 = arith.constant 0 : index
    %c0_15 = arith.constant 0 : index
    %c0_16 = arith.constant 0 : index
    %20 = vector.load %arg6[%c0_13, %c0_14, %c0_15, %c0_16] : memref<2x2x128x128xbf16, #tpu.memory_space<vmem>>, vector<1x2x128x128xbf16>
    %21 = vector.shape_cast %20 : vector<1x2x128x128xbf16> to vector<2x128x128xbf16>
    %c0_17 = arith.constant 0 : index
    %c0_18 = arith.constant 0 : index
    %c0_19 = arith.constant 0 : index
    %22 = vector.load %arg7[%c0_17, %c0_18, %c0_19] : memref<2x2x128xf32, #tpu.memory_space<vmem>>, vector<1x2x128xf32>
    %23 = vector.shape_cast %22 : vector<1x2x128xf32> to vector<2x128xf32>
    %c0_20 = arith.constant 0 : index
    %c0_21 = arith.constant 0 : index
    %c0_22 = arith.constant 0 : index
    %24 = vector.load %arg8[%c0_20, %c0_21, %c0_22] : memref<2x2x128xf32, #tpu.memory_space<vmem>>, vector<1x2x128xf32>
    %25 = vector.shape_cast %24 : vector<1x2x128xf32> to vector<2x128xf32>
    %26 = arith.truncf %19 : vector<8x128xf32> to vector<8x128xbf16>
    %27 = vector.extract_strided_slice %21 {offsets = [0, 0, 0], sizes = [1, 128, 128], strides = [1, 1, 1]} : vector<2x128x128xbf16> to vector<1x128x128xbf16>
    %28 = vector.shape_cast %27 : vector<1x128x128xbf16> to vector<128x128xbf16>
    %cst_23 = arith.constant dense<0.000000e+00> : vector<8x128xf32>
    %29 = tpu.matmul %26, %28, %cst_23 {dimension_numbers = #tpu.dot_dimension_numbers<[1], [0], [0], [1], [0, 0, 1, 1], [], []>} : vector<8x128xbf16>, vector<128x128xbf16>, vector<8x128xf32> -> vector<8x128xf32>
    %30 = vector.extract_strided_slice %23 {offsets = [0, 0], sizes = [1, 128], strides = [1, 1]} : vector<2x128xf32> to vector<1x128xf32>
    %31 = vector.broadcast %30 : vector<1x128xf32> to vector<8x128xf32>
    %32 = arith.addf %29, %31 : vector<8x128xf32>
    %cst_24 = arith.constant 5.000000e-01 : f32
    %33 = vector.broadcast %cst_24 : f32 to vector<8x128xf32>
    %34 = arith.mulf %33, %32 : vector<8x128xf32>
    %cst_25 = arith.constant 0.707106769 : f32
    %35 = vector.broadcast %cst_25 : f32 to vector<8x128xf32>
    %36 = arith.mulf %32, %35 : vector<8x128xf32>
    %37 = math.erf %36 : vector<8x128xf32>
    %cst_26 = arith.constant 1.000000e+00 : f32
    %38 = vector.broadcast %cst_26 : f32 to vector<8x128xf32>
    %39 = arith.addf %38, %37 : vector<8x128xf32>
    %40 = arith.mulf %34, %39 : vector<8x128xf32>
    %41 = arith.truncf %40 : vector<8x128xf32> to vector<8x128xbf16>
    %42 = vector.extract_strided_slice %21 {offsets = [1, 0, 0], sizes = [1, 128, 128], strides = [1, 1, 1]} : vector<2x128x128xbf16> to vector<1x128x128xbf16>
    %43 = vector.shape_cast %42 : vector<1x128x128xbf16> to vector<128x128xbf16>
    %cst_27 = arith.constant dense<0.000000e+00> : vector<8x128xf32>
    %44 = tpu.matmul %41, %43, %cst_27 {dimension_numbers = #tpu.dot_dimension_numbers<[1], [0], [0], [1], [0, 0, 1, 1], [], []>} : vector<8x128xbf16>, vector<128x128xbf16>, vector<8x128xf32> -> vector<8x128xf32>
    %45 = vector.extract_strided_slice %23 {offsets = [1, 0], sizes = [1, 128], strides = [1, 1]} : vector<2x128xf32> to vector<1x128xf32>
    %46 = vector.broadcast %45 : vector<1x128xf32> to vector<8x128xf32>
    %47 = arith.addf %44, %46 : vector<8x128xf32>
    %cst_28 = arith.constant 5.000000e-01 : f32
    %48 = vector.broadcast %cst_28 : f32 to vector<8x128xf32>
    %49 = arith.mulf %48, %47 : vector<8x128xf32>
    %cst_29 = arith.constant 0.707106769 : f32
    %50 = vector.broadcast %cst_29 : f32 to vector<8x128xf32>
    %51 = arith.mulf %47, %50 : vector<8x128xf32>
    %52 = math.erf %51 : vector<8x128xf32>
    %cst_30 = arith.constant 1.000000e+00 : f32
    %53 = vector.broadcast %cst_30 : f32 to vector<8x128xf32>
    %54 = arith.addf %53, %52 : vector<8x128xf32>
    %55 = arith.mulf %49, %54 : vector<8x128xf32>
    %56 = arith.addf %55, %19 : vector<8x128xf32>
    %cst_31 = arith.constant dense<0.000000e+00> : vector<8xf32>
    %57 = vector.multi_reduction <add>, %56, %cst_31 [1] : vector<8x128xf32> to vector<8xf32>
    %58 = vector.shape_cast %57 : vector<8xf32> to vector<8x1xf32>
    %cst_32 = arith.constant 1.280000e+02 : f32
    %59 = vector.broadcast %cst_32 : f32 to vector<8x1xf32>
    %60 = arith.divf %58, %59 : vector<8x1xf32>
    %61 = vector.broadcast %60 : vector<8x1xf32> to vector<8x128xf32>
    %62 = arith.subf %56, %61 : vector<8x128xf32>
    %63 = arith.mulf %62, %62 : vector<8x128xf32>
    %cst_33 = arith.constant dense<0.000000e+00> : vector<8xf32>
    %64 = vector.multi_reduction <add>, %63, %cst_33 [1] : vector<8x128xf32> to vector<8xf32>
    %65 = vector.shape_cast %64 : vector<8xf32> to vector<8x1xf32>
    %cst_34 = arith.constant 1.280000e+02 : f32
    %66 = vector.broadcast %cst_34 : f32 to vector<8x1xf32>
    %67 = arith.divf %65, %66 : vector<8x1xf32>
    %68 = vector.broadcast %60 : vector<8x1xf32> to vector<8x128xf32>
    %69 = arith.subf %56, %68 : vector<8x128xf32>
    %cst_35 = arith.constant 9.99999974E-6 : f32
    %70 = vector.broadcast %cst_35 : f32 to vector<8x1xf32>
    %71 = arith.addf %67, %70 : vector<8x1xf32>
    %72 = math.rsqrt %71 : vector<8x1xf32>
    %73 = vector.broadcast %72 : vector<8x1xf32> to vector<8x128xf32>
    %74 = arith.mulf %69, %73 : vector<8x128xf32>
    %75 = vector.extract_strided_slice %25 {offsets = [0, 0], sizes = [1, 128], strides = [1, 1]} : vector<2x128xf32> to vector<1x128xf32>
    %76 = vector.broadcast %75 : vector<1x128xf32> to vector<8x128xf32>
    %77 = arith.mulf %74, %76 : vector<8x128xf32>
    %78 = vector.extract_strided_slice %25 {offsets = [1, 0], sizes = [1, 128], strides = [1, 1]} : vector<2x128xf32> to vector<1x128xf32>
    %79 = vector.broadcast %78 : vector<1x128xf32> to vector<8x128xf32>
    %80 = arith.addf %77, %79 : vector<8x128xf32>
    %c1 = arith.constant 1 : index
    %c0_36 = arith.constant 0 : index
    %c0_37 = arith.constant 0 : index
    %c0_38 = arith.constant 0 : index
    %81 = vector.load %arg6[%c1, %c0_36, %c0_37, %c0_38] : memref<2x2x128x128xbf16, #tpu.memory_space<vmem>>, vector<1x2x128x128xbf16>
    %82 = vector.shape_cast %81 : vector<1x2x128x128xbf16> to vector<2x128x128xbf16>
    %c1_39 = arith.constant 1 : index
    %c0_40 = arith.constant 0 : index
    %c0_41 = arith.constant 0 : index
    %83 = vector.load %arg7[%c1_39, %c0_40, %c0_41] : memref<2x2x128xf32, #tpu.memory_space<vmem>>, vector<1x2x128xf32>
    %84 = vector.shape_cast %83 : vector<1x2x128xf32> to vector<2x128xf32>
    %c1_42 = arith.constant 1 : index
    %c0_43 = arith.constant 0 : index
    %c0_44 = arith.constant 0 : index
    %85 = vector.load %arg8[%c1_42, %c0_43, %c0_44] : memref<2x2x128xf32, #tpu.memory_space<vmem>>, vector<1x2x128xf32>
    %86 = vector.shape_cast %85 : vector<1x2x128xf32> to vector<2x128xf32>
    %87 = arith.truncf %80 : vector<8x128xf32> to vector<8x128xbf16>
    %88 = vector.extract_strided_slice %82 {offsets = [0, 0, 0], sizes = [1, 128, 128], strides = [1, 1, 1]} : vector<2x128x128xbf16> to vector<1x128x128xbf16>
    %89 = vector.shape_cast %88 : vector<1x128x128xbf16> to vector<128x128xbf16>
    %cst_45 = arith.constant dense<0.000000e+00> : vector<8x128xf32>
    %90 = tpu.matmul %87, %89, %cst_45 {dimension_numbers = #tpu.dot_dimension_numbers<[1], [0], [0], [1], [0, 0, 1, 1], [], []>} : vector<8x128xbf16>, vector<128x128xbf16>, vector<8x128xf32> -> vector<8x128xf32>
    %91 = vector.extract_strided_slice %84 {offsets = [0, 0], sizes = [1, 128], strides = [1, 1]} : vector<2x128xf32> to vector<1x128xf32>
    %92 = vector.broadcast %91 : vector<1x128xf32> to vector<8x128xf32>
    %93 = arith.addf %90, %92 : vector<8x128xf32>
    %cst_46 = arith.constant 5.000000e-01 : f32
    %94 = vector.broadcast %cst_46 : f32 to vector<8x128xf32>
    %95 = arith.mulf %94, %93 : vector<8x128xf32>
    %cst_47 = arith.constant 0.707106769 : f32
    %96 = vector.broadcast %cst_47 : f32 to vector<8x128xf32>
    %97 = arith.mulf %93, %96 : vector<8x128xf32>
    %98 = math.erf %97 : vector<8x128xf32>
    %cst_48 = arith.constant 1.000000e+00 : f32
    %99 = vector.broadcast %cst_48 : f32 to vector<8x128xf32>
    %100 = arith.addf %99, %98 : vector<8x128xf32>
    %101 = arith.mulf %95, %100 : vector<8x128xf32>
    %102 = arith.truncf %101 : vector<8x128xf32> to vector<8x128xbf16>
    %103 = vector.extract_strided_slice %82 {offsets = [1, 0, 0], sizes = [1, 128, 128], strides = [1, 1, 1]} : vector<2x128x128xbf16> to vector<1x128x128xbf16>
    %104 = vector.shape_cast %103 : vector<1x128x128xbf16> to vector<128x128xbf16>
    %cst_49 = arith.constant dense<0.000000e+00> : vector<8x128xf32>
    %105 = tpu.matmul %102, %104, %cst_49 {dimension_numbers = #tpu.dot_dimension_numbers<[1], [0], [0], [1], [0, 0, 1, 1], [], []>} : vector<8x128xbf16>, vector<128x128xbf16>, vector<8x128xf32> -> vector<8x128xf32>
    %106 = vector.extract_strided_slice %84 {offsets = [1, 0], sizes = [1, 128], strides = [1, 1]} : vector<2x128xf32> to vector<1x128xf32>
    %107 = vector.broadcast %106 : vector<1x128xf32> to vector<8x128xf32>
    %108 = arith.addf %105, %107 : vector<8x128xf32>
    %cst_50 = arith.constant 5.000000e-01 : f32
    %109 = vector.broadcast %cst_50 : f32 to vector<8x128xf32>
    %110 = arith.mulf %109, %108 : vector<8x128xf32>
    %cst_51 = arith.constant 0.707106769 : f32
    %111 = vector.broadcast %cst_51 : f32 to vector<8x128xf32>
    %112 = arith.mulf %108, %111 : vector<8x128xf32>
    %113 = math.erf %112 : vector<8x128xf32>
    %cst_52 = arith.constant 1.000000e+00 : f32
    %114 = vector.broadcast %cst_52 : f32 to vector<8x128xf32>
    %115 = arith.addf %114, %113 : vector<8x128xf32>
    %116 = arith.mulf %110, %115 : vector<8x128xf32>
    %117 = arith.addf %116, %80 : vector<8x128xf32>
    %cst_53 = arith.constant dense<0.000000e+00> : vector<8xf32>
    %118 = vector.multi_reduction <add>, %117, %cst_53 [1] : vector<8x128xf32> to vector<8xf32>
    %119 = vector.shape_cast %118 : vector<8xf32> to vector<8x1xf32>
    %cst_54 = arith.constant 1.280000e+02 : f32
    %120 = vector.broadcast %cst_54 : f32 to vector<8x1xf32>
    %121 = arith.divf %119, %120 : vector<8x1xf32>
    %122 = vector.broadcast %121 : vector<8x1xf32> to vector<8x128xf32>
    %123 = arith.subf %117, %122 : vector<8x128xf32>
    %124 = arith.mulf %123, %123 : vector<8x128xf32>
    %cst_55 = arith.constant dense<0.000000e+00> : vector<8xf32>
    %125 = vector.multi_reduction <add>, %124, %cst_55 [1] : vector<8x128xf32> to vector<8xf32>
    %126 = vector.shape_cast %125 : vector<8xf32> to vector<8x1xf32>
    %cst_56 = arith.constant 1.280000e+02 : f32
    %127 = vector.broadcast %cst_56 : f32 to vector<8x1xf32>
    %128 = arith.divf %126, %127 : vector<8x1xf32>
    %129 = vector.broadcast %121 : vector<8x1xf32> to vector<8x128xf32>
    %130 = arith.subf %117, %129 : vector<8x128xf32>
    %cst_57 = arith.constant 9.99999974E-6 : f32
    %131 = vector.broadcast %cst_57 : f32 to vector<8x1xf32>
    %132 = arith.addf %128, %131 : vector<8x1xf32>
    %133 = math.rsqrt %132 : vector<8x1xf32>
    %134 = vector.broadcast %133 : vector<8x1xf32> to vector<8x128xf32>
    %135 = arith.mulf %130, %134 : vector<8x128xf32>
    %136 = vector.extract_strided_slice %86 {offsets = [0, 0], sizes = [1, 128], strides = [1, 1]} : vector<2x128xf32> to vector<1x128xf32>
    %137 = vector.broadcast %136 : vector<1x128xf32> to vector<8x128xf32>
    %138 = arith.mulf %135, %137 : vector<8x128xf32>
    %139 = vector.extract_strided_slice %86 {offsets = [1, 0], sizes = [1, 128], strides = [1, 1]} : vector<2x128xf32> to vector<1x128xf32>
    %140 = vector.broadcast %139 : vector<1x128xf32> to vector<8x128xf32>
    %141 = arith.addf %138, %140 : vector<8x128xf32>
    %142 = arith.truncf %141 : vector<8x128xf32> to vector<8x128xbf16>
    %c0_58 = arith.constant 0 : index
    %c0_59 = arith.constant 0 : index
    %143 = vector.load %arg9[%c0_58, %c0_59] : memref<128x128xbf16, #tpu.memory_space<vmem>>, vector<128x128xbf16>
    %cst_60 = arith.constant dense<0.000000e+00> : vector<8x128xf32>
    %144 = tpu.matmul %142, %143, %cst_60 {dimension_numbers = #tpu.dot_dimension_numbers<[1], [0], [0], [1], [0, 0, 1, 1], [], []>} : vector<8x128xbf16>, vector<128x128xbf16>, vector<8x128xf32> -> vector<8x128xf32>
    %c0_61 = arith.constant 0 : index
    %c0_62 = arith.constant 0 : index
    %145 = vector.load %arg10[%c0_61, %c0_62] : memref<1x128xf32, #tpu.memory_space<vmem>>, vector<1x128xf32>
    %146 = vector.broadcast %145 : vector<1x128xf32> to vector<8x128xf32>
    %147 = arith.addf %144, %146 : vector<8x128xf32>
    %c0_63 = arith.constant 0 : index
    %c0_64 = arith.constant 0 : index
    %148 = vector.load %arg11[%c0_63, %c0_64] : memref<8x128xf32, #tpu.memory_space<vmem>>, vector<8x128xf32>
    tpu.vector_store %arg11[%c0_63, %c0_64], %147 {strides = array<i32>} : memref<8x128xf32, #tpu.memory_space<vmem>>, vector<8x128xf32>,
    return
  }
  func.func @transform_0(%arg0: i32) -> (i32, i32) {
    %c0_i32 = arith.constant 0 : i32
    %c0_i32_0 = arith.constant 0 : i32
    return %arg0, %c0_i32 : i32, i32
  }
  func.func @transform_1(%arg0: i32) -> (i32, i32) {
    %c0_i32 = arith.constant 0 : i32
    %c0_i32_0 = arith.constant 0 : i32
    return %arg0, %c0_i32 : i32, i32
  }
  func.func @transform_2(%arg0: i32) -> (i32, i32) {
    %c0_i32 = arith.constant 0 : i32
    %c0_i32_0 = arith.constant 0 : i32
    %c0_i32_1 = arith.constant 0 : i32
    return %c0_i32, %c0_i32_0 : i32, i32
  }
  func.func @transform_3(%arg0: i32) -> (i32, i32) {
    %c0_i32 = arith.constant 0 : i32
    %c0_i32_0 = arith.constant 0 : i32
    %c0_i32_1 = arith.constant 0 : i32
    return %c0_i32, %c0_i32_0 : i32, i32
  }
  func.func @transform_4(%arg0: i32) -> (i32, i32) {
    %c0_i32 = arith.constant 0 : i32
    %c0_i32_0 = arith.constant 0 : i32
    %c0_i32_1 = arith.constant 0 : i32
    return %c0_i32, %c0_i32_0 : i32, i32
  }
  func.func @transform_5(%arg0: i32) -> (i32, i32, i32, i32) {
    %c0_i32 = arith.constant 0 : i32
    %c0_i32_0 = arith.constant 0 : i32
    %c0_i32_1 = arith.constant 0 : i32
    %c0_i32_2 = arith.constant 0 : i32
    %c0_i32_3 = arith.constant 0 : i32
    return %c0_i32, %c0_i32_0, %c0_i32_1, %c0_i32_2 : i32, i32, i32, i32
  }
  func.func @transform_6(%arg0: i32) -> (i32, i32, i32) {
    %c0_i32 = arith.constant 0 : i32
    %c0_i32_0 = arith.constant 0 : i32
    %c0_i32_1 = arith.constant 0 : i32
    %c0_i32_2 = arith.constant 0 : i32
    return %c0_i32, %c0_i32_0, %c0_i32_1 : i32, i32, i32
  }
  func.func @transform_7(%arg0: i32) -> (i32, i32, i32) {
    %c0_i32 = arith.constant 0 : i32
    %c0_i32_0 = arith.constant 0 : i32
    %c0_i32_1 = arith.constant 0 : i32
    %c0_i32_2 = arith.constant 0 : i32
    return %c0_i32, %c0_i32_0, %c0_i32_1 : i32, i32, i32
  }
  func.func @transform_8(%arg0: i32) -> (i32, i32) {
    %c0_i32 = arith.constant 0 : i32
    %c0_i32_0 = arith.constant 0 : i32
    %c0_i32_1 = arith.constant 0 : i32
    return %c0_i32, %c0_i32_0 : i32, i32
  }
  func.func @transform_9(%arg0: i32) -> (i32, i32) {
    %c0_i32 = arith.constant 0 : i32
    %c0_i32_0 = arith.constant 0 : i32
    %c0_i32_1 = arith.constant 0 : i32
    return %c0_i32, %c0_i32_0 : i32, i32
  }
  func.func @transform_10(%arg0: i32) -> (i32, i32) {
    %c0_i32 = arith.constant 0 : i32
    %c0_i32_0 = arith.constant 0 : i32
    return %arg0, %c0_i32 : i32, i32
  }
}

</mosaic_0001>

<llo_original>
// kernel: tpu_custom_call.1
$region0: #{tpu_custom_call.1}
  #allocation0 [shape = 'u32[]', space=smem, size = 0x4, offset = 0x4, fixed_abs, tag = 'smem constant byte address 0x4 - core index']
  #allocation1 [shape = 'u32[72,128]{1,0:T(1,128)}', space=vmem, size = 0x9000, scoped, tag = 'internal scratch']
  %s0 = inlined_call_operand.vmem [shape: f32[8,32], index: 0, kind: input, shape index: {}]
  %s1 = inlined_call_operand.vmem [shape: f32[8,2], index: 1, kind: input, shape index: {}]
  %s2 = inlined_call_operand.hbm [shape: bf16[32,128], index: 2, kind: input, shape index: {}]
  %s3 = inlined_call_operand.hbm [shape: bf16[2,128], index: 3, kind: input, shape index: {}]
  %s4 = inlined_call_operand.hbm [shape: f32[1,128], index: 4, kind: input, shape index: {}]
  %s5 = inlined_call_operand.hbm [shape: bf16[2,2,128,128], index: 5, kind: input, shape index: {}]
  %s6 = inlined_call_operand.vmem [shape: f32[2,2,128], index: 6, kind: input, shape index: {}]
  %s7 = inlined_call_operand.vmem [shape: f32[2,2,128], index: 7, kind: input, shape index: {}]
  %s8 = inlined_call_operand.hbm [shape: bf16[128,128], index: 8, kind: input, shape index: {}]
  %s9 = inlined_call_operand.vmem [shape: f32[1,128], index: 9, kind: input, shape index: {}]
  %s10 = inlined_call_operand.hbm [shape: f32[8,128], index: 10, kind: output, shape index: {}]
  %s11 = sld [smem:[#allocation0]]
  $region70: #{tpu_custom_call.1} parent=0
    _
  %s13 = ssub.s32 1, %s11
  %s14 = scalar_select 0, %s13, %s11
  $region1: #{tpu_custom_call.1} parent=0
    #allocation2 [shape = 'u8[8192]{0}', space=vmem, size = 0x2000, scoped, tag = 'input window, operand 2, single buffered']
    #allocation3 [shape = 's32[1]{0}', space=sflag, size = 0x4, scoped, tag = 'scoped memory for tpu_custom_call.1']
    #allocation4 [shape = 's32[1]{0}', space=sflag, size = 0x4, scoped, tag = 'scoped memory for tpu_custom_call.1']
    #allocation5 [shape = 'u8[512]{0}', space=vmem, size = 0x400, scoped, tag = 'input window, operand 3, single buffered']
    #allocation6 [shape = 's32[1]{0}', space=sflag, size = 0x4, scoped, tag = 'scoped memory for tpu_custom_call.1']
    #allocation7 [shape = 'u8[512]{0}', space=vmem, size = 0x400, scoped, tag = 'input window, operand 4, single buffered']
    #allocation8 [shape = 'u8[131072]{0}', space=vmem, size = 0x20000, scoped, tag = 'input window, operand 5, single buffered']
    #allocation9 [shape = 's32[1]{0}', space=sflag, size = 0x4, scoped, tag = 'scoped memory for tpu_custom_call.1']
    #allocation10 [shape = 'u8[32768]{0}', space=vmem, size = 0x8000, scoped, tag = 'input window, operand 8, single buffered']
    #allocation11 [shape = 'u8[4096]{0}', space=vmem, size = 0x1000, scoped, tag = 'output window, operand 0, single buffered']
    %15 = vsyncpa [#allocation3], 0
    %16 = vsyncpa [#allocation6], 0
    %17 = vsyncpa [#allocation9], 0
    %18 = vsyncpa [#allocation4], 0
    // Predicated region
    $region2: #{tpu_custom_call.1} parent=1 // pred_check
      _
    $region3: #{tpu_custom_call.1} parent=1 // pred_check_branch
      %20 = sbr.rel (0) target = $region5
    $region4: #{tpu_custom_call.1} parent=1 // pred_region
      _
    $region5: #{tpu_custom_call.1} parent=1 // pred_fallthru
      _
    // Predicated region
    $region6: #{tpu_custom_call.1} parent=1 // pred_check
      _
    $region7: #{tpu_custom_call.1} parent=1 // pred_check_branch
      %22 = sbr.rel (0) target = $region9
    $region8: #{tpu_custom_call.1} parent=1 // pred_region
      _
    $region9: #{tpu_custom_call.1} parent=1 // pred_fallthru
      _
    // Predicated region
    $region10: #{tpu_custom_call.1} parent=1 // pred_check
      _
    $region11: #{tpu_custom_call.1} parent=1 // pred_check_branch
      %24 = sbr.rel (0) target = $region13
    $region12: #{tpu_custom_call.1} parent=1 // pred_region
      %26 = vsyncadd [#allocation3], 0
      %s27 = sshll.u32 %s2, 4
      %s28 = int_to_ptr.hbm [resolvable:$true] %s27
      %s29 = sshll.u32 [#allocation2], 4
      %s30 = int_to_ptr.vmem [resolvable:$true] %s29
      %35 = dma.hbm_to_vmem [thread:$0]  %s28, 256, %s30, [#allocation3], 64, 64, 4
    $region13: #{tpu_custom_call.1} parent=1 // pred_fallthru
      _
    // Predicated region
    $region14: #{tpu_custom_call.1} parent=1 // pred_check
      _
    $region15: #{tpu_custom_call.1} parent=1 // pred_check_branch
      %37 = sbr.rel (0) target = $region17
    $region16: #{tpu_custom_call.1} parent=1 // pred_region
      %39 = vsyncadd [#allocation6], 0
      %s41 = sshll.u32 %s3, 4
      %s42 = int_to_ptr.hbm [resolvable:$true] %s41
      %s43 = sshll.u32 [#allocation5], 4
      %s44 = int_to_ptr.vmem [resolvable:$true] %s43
      %46 = dma.hbm_to_vmem [thread:$0]  %s42, 16, %s44, [#allocation6]
    $region17: #{tpu_custom_call.1} parent=1 // pred_fallthru
      _
    // Predicated region
    $region18: #{tpu_custom_call.1} parent=1 // pred_check
      _
    $region19: #{tpu_custom_call.1} parent=1 // pred_check_branch
      %48 = sbr.rel (0) target = $region21
    $region20: #{tpu_custom_call.1} parent=1 // pred_region
      %50 = vsyncadd [#allocation6], 0
      %s52 = sshll.u32 %s4, 4
      %s53 = int_to_ptr.hbm [resolvable:$true] %s52
      %s54 = sshll.u32 [#allocation7], 4
      %s55 = int_to_ptr.vmem [resolvable:$true] %s54
      %57 = dma.hbm_to_vmem [thread:$0]  %s53, 16, %s55, [#allocation6]
    $region21: #{tpu_custom_call.1} parent=1 // pred_fallthru
      _
    // Predicated region
    $region22: #{tpu_custom_call.1} parent=1 // pred_check
      _
    $region23: #{tpu_custom_call.1} parent=1 // pred_check_branch
      %59 = sbr.rel (0) target = $region25
    $region24: #{tpu_custom_call.1} parent=1 // pred_region
      %61 = vsyncadd [#allocation9], 0
      %s62 = sshll.u32 %s5, 4
      %s63 = int_to_ptr.hbm [resolvable:$true] %s62
      %s64 = sshll.u32 [#allocation8], 4
      %s65 = int_to_ptr.vmem [resolvable:$true] %s64
      %70 = dma.hbm_to_vmem [thread:$0]  %s63, 4096, %s65, [#allocation9], 64, 64, 4
    $region25: #{tpu_custom_call.1} parent=1 // pred_fallthru
      _
    // Predicated region
    $region26: #{tpu_custom_call.1} parent=1 // pred_check
      _
    $region27: #{tpu_custom_call.1} parent=1 // pred_check_branch
      %72 = sbr.rel (0) target = $region29
    $region28: #{tpu_custom_call.1} parent=1 // pred_region
      _
    $region29: #{tpu_custom_call.1} parent=1 // pred_fallthru
      _
    // Predicated region
    $region30: #{tpu_custom_call.1} parent=1 // pred_check
      _
    $region31: #{tpu_custom_call.1} parent=1 // pred_check_branch
      %74 = sbr.rel (0) target = $region33
    $region32: #{tpu_custom_call.1} parent=1 // pred_region
      _
    $region33: #{tpu_custom_call.1} parent=1 // pred_fallthru
      _
    // Predicated region
    $region34: #{tpu_custom_call.1} parent=1 // pred_check
      _
    $region35: #{tpu_custom_call.1} parent=1 // pred_check_branch
      %76 = sbr.rel (0) target = $region37
    $region36: #{tpu_custom_call.1} parent=1 // pred_region
      %78 = vsyncadd [#allocation9], 0
      %s79 = sshll.u32 %s8, 4
      %s80 = int_to_ptr.hbm [resolvable:$true] %s79
      %s81 = sshll.u32 [#allocation10], 4
      %s82 = int_to_ptr.vmem [resolvable:$true] %s81
      %87 = dma.hbm_to_vmem [thread:$0]  %s80, 1024, %s82, [#allocation9], 64, 64, 4
    $region37: #{tpu_custom_call.1} parent=1 // pred_fallthru
      _
    // Predicated region
    $region38: #{tpu_custom_call.1} parent=1 // pred_check
      _
    $region39: #{tpu_custom_call.1} parent=1 // pred_check_branch
      %89 = sbr.rel (0) target = $region41
    $region40: #{tpu_custom_call.1} parent=1 // pred_region
      _
    $region41: #{tpu_custom_call.1} parent=1 // pred_fallthru
      _
    // Predicated region
    $region42: #{tpu_custom_call.1} parent=1 // pred_check
      _
    $region43: #{tpu_custom_call.1} parent=1 // pred_check_branch
      %91 = sbr.rel (0) target = $region45
    $region44: #{tpu_custom_call.1} parent=1 // pred_region
      %93 = dma.done [#allocation3], 256
    $region45: #{tpu_custom_call.1} parent=1 // pred_fallthru
      _
    // Predicated region
    $region46: #{tpu_custom_call.1} parent=1 // pred_check
      _
    $region47: #{tpu_custom_call.1} parent=1 // pred_check_branch
      %95 = sbr.rel (0) target = $region49
    $region48: #{tpu_custom_call.1} parent=1 // pred_region
      %97 = dma.done [#allocation6], 16
    $region49: #{tpu_custom_call.1} parent=1 // pred_fallthru
      _
    // Predicated region
    $region50: #{tpu_custom_call.1} parent=1 // pred_check
      _
    $region51: #{tpu_custom_call.1} parent=1 // pred_check_branch
      %99 = sbr.rel (0) target = $region53
    $region52: #{tpu_custom_call.1} parent=1 // pred_region
      %101 = dma.done [#allocation6], 16
    $region53: #{tpu_custom_call.1} parent=1 // pred_fallthru
      _
    // Predicated region
    $region54: #{tpu_custom_call.1} parent=1 // pred_check
      _
    $region55: #{tpu_custom_call.1} parent=1 // pred_check_branch
      %103 = sbr.rel (0) target = $region57
    $region56: #{tpu_custom_call.1} parent=1 // pred_region
      %105 = dma.done [#allocation9], 4096
    $region57: #{tpu_custom_call.1} parent=1 // pred_fallthru
      _
    // Predicated region
    $region58: #{tpu_custom_call.1} parent=1 // pred_check
      _
    $region59: #{tpu_custom_call.1} parent=1 // pred_check_branch
      %107 = sbr.rel (0) target = $region61
    $region60: #{tpu_custom_call.1} parent=1 // pred_region
      %109 = dma.done [#allocation9], 1024
    $region61: #{tpu_custom_call.1} parent=1 // pred_fallthru
      _
    %v111 = vld [vmem:[%s0] sm:$0xff]
    %v112 = vpack.c.bf16 %v111, %v111
    %v113 = vld [vmem:[#allocation2] sm:$0xf]
    %v114 = vld [vmem:[#allocation2 + $0x4] sm:$0xf]
    %v115 = vld [vmem:[#allocation2 + $0x8] sm:$0xf]
    %v116 = vld [vmem:[#allocation2 + $0xc] sm:$0xf]
    %v117 = vld [vmem:[%s1] sm:$0xff]
    %v118 = vpack.c.bf16 %v117, %v117
    %v119 = vld [vmem:[#allocation5] sm:$0x1]
    %vm120 = vcmask 15360
    %v122 = vsel %vm120, %v118, 0
    %vm124 = vcmask 1040384
    %v126 = vsel %vm124, %v119, 0
    %128 = vmatpush.bf16.msra.mxu0 0
    %129 = vmatpush.bf16.msra.mxu0 0
    %130 = vmatpush.bf16.msra.mxu0 0
    %131 = vmatpush.bf16.msra.mxu0 0
    %132 = vmatpush.bf16.msra.mxu0 0
    %133 = vmatpush.bf16.msra.mxu0 0
    %134 = vmatpush.bf16.msra.mxu0 0
    %135 = vmatpush.bf16.msra.mxu0 %v126
    %136 = vmatmul.bf16.gmra.mxu0 %v122
    %v137 = vpop.f32.mrf.mxu0
    %v138 = vadd.f32 0.0, %v137
    %v139 = vpop.f32.mrf.mxu0
    %140 = vdwg.mxu0
    %v145 = vunpack.c.l.b16 %v113
    %v146 = vunpack.c.l.b16 %v114
    %v147 = vunpack.c.l.b16 %v115
    %v148 = vunpack.c.l.b16 %v116
    %v149 = vpack.c.b16 %v146, %v145
    %v150 = vpack.c.b16 %v148, %v147
    %vm153 = vcmask 261120
    %v155 = vsel %vm153, %v112, 0
    %157 = vmatpush.bf16.msra.mxu0 0
    %158 = vmatpush.bf16.msra.mxu0 0
    %159 = vmatpush.bf16.msra.mxu0 0
    %160 = vmatpush.bf16.msra.mxu0 0
    %161 = vmatpush.bf16.msra.mxu0 0
    %162 = vmatpush.bf16.msra.mxu0 0
    %163 = vmatpush.bf16.msra.mxu0 %v150
    %164 = vmatpush.bf16.msra.mxu0 %v149
    %165 = vmatmul.bf16.gmra.mxu0 %v155
    %v166 = vpop.f32.mrf.mxu0
    %v167 = vadd.f32 %v138, %v166
    %v168 = vpop.f32.mrf.mxu0
    %169 = vdwg.mxu0
    %v170 = vld [vmem:[#allocation7] sm:$0x1]
    %v172 = vperm.slane %v170, 0
    %v174 = vadd.f32 %v167, %v172
    %v175 = vmul.f32 %v174, 0.5
    %v176 = vmul.f32 %v174, 0.70710677
    %v177 = vmul.f32 %v176, %v176
    %v178 = vmin.f32 16.0, %v177
    %v179 = vmul.f32 %v178, 2.1237322e-06
    %v180 = vadd.f32 %v179, 0.00028619796
    %v181 = vmul.f32 %v178, %v180
    %v182 = vadd.f32 %v181, 0.0036580483
    %v183 = vmul.f32 %v178, %v182
    %v184 = vadd.f32 %v183, 0.05243302
    %v185 = vmul.f32 %v178, %v184
    %v186 = vadd.f32 %v185, 0.18741608
    %v187 = vmul.f32 %v178, %v186
    %v188 = vadd.f32 %v187, 1.1283791
    %v189 = vmul.f32 %v176, %v188
    %v190 = vmul.f32 %v178, 3.8918573e-05
    %v191 = vadd.f32 %v190, 0.001143296
    %v192 = vmul.f32 %v178, %v191
    %v193 = vadd.f32 %v192, 0.014752088
    %v194 = vmul.f32 %v178, %v193
    %v195 = vadd.f32 %v194, 0.112945676
    %v196 = vmul.f32 %v178, %v195
    %v197 = vadd.f32 %v196, 0.4994258
    %v198 = vmul.f32 %v178, %v197
    %v199 = vadd.f32 %v198, 1.0
    %v200 = vrcp.pop %v199
    %v201 = vmul.f32 %v199, %v200
    %v202 = vsub.f32 1.0, %v201
    %v203 = vmul.f32 %v200, %v202
    %v204 = vadd.f32 %v200, %v203
    %vm205 = vweird.f32 %v199
    %vm206 = vweird.f32 %v200
    %vm207 = vmor %vm205, %vm206
    %v208 = vsel %vm207, %v200, %v204
    %v209 = vand.u32 2147483647, %v199
    %vm210 = vcmp.eq.f32.partialorder %v209, 8.507059e+37
    %v211 = vand.u32 %v199, 2147483648
    %v212 = vor.u32 1.1754944e-38, %v211
    %v213 = vsel %vm210, %v212, %v208
    %v214 = vmul.f32 %v189, %v213
    %v215 = vmin.f32 %v214, 1.0
    %v216 = vmax.f32 %v215, -1.0
    %v217 = vadd.f32 %v216, 1.0
    %v218 = vmul.f32 %v175, %v217
    %v219 = vld [vmem:[#allocation8] sm:$0xf]
    %v220 = vld [vmem:[#allocation8 + $0x4] sm:$0xf]
    %v221 = vld [vmem:[#allocation8 + $0x8] sm:$0xf]
    %v222 = vld [vmem:[#allocation8 + $0xc] sm:$0xf]
    %v223 = vld [vmem:[#allocation8 + $0x10] sm:$0xf]
    %v224 = vld [vmem:[#allocation8 + $0x14] sm:$0xf]
    %v225 = vld [vmem:[#allocation8 + $0x18] sm:$0xf]
    %v226 = vld [vmem:[#allocation8 + $0x1c] sm:$0xf]
    %v227 = vld [vmem:[#allocation8 + $0x20] sm:$0xf]
    %v228 = vld [vmem:[#allocation8 + $0x24] sm:$0xf]
    %v229 = vld [vmem:[#allocation8 + $0x28] sm:$0xf]
    %v230 = vld [vmem:[#allocation8 + $0x2c] sm:$0xf]
    %v231 = vld [vmem:[#allocation8 + $0x30] sm:$0xf]
    %v232 = vld [vmem:[#allocation8 + $0x34] sm:$0xf]
    %v233 = vld [vmem:[#allocation8 + $0x38] sm:$0xf]
    %v234 = vld [vmem:[#allocation8 + $0x3c] sm:$0xf]
    %v235 = vld [vmem:[#allocation8 + $0x40] sm:$0xf]
    %v236 = vld [vmem:[#allocation8 + $0x44] sm:$0xf]
    %v237 = vld [vmem:[#allocation8 + $0x48] sm:$0xf]
    %v238 = vld [vmem:[#allocation8 + $0x4c] sm:$0xf]
    %v239 = vld [vmem:[#allocation8 + $0x50] sm:$0xf]
    %v240 = vld [vmem:[#allocation8 + $0x54] sm:$0xf]
    %v241 = vld [vmem:[#allocation8 + $0x58] sm:$0xf]
    %v242 = vld [vmem:[#allocation8 + $0x5c] sm:$0xf]
    %v243 = vld [vmem:[#allocation8 + $0x60] sm:$0xf]
    %v244 = vld [vmem:[#allocation8 + $0x64] sm:$0xf]
    %v245 = vld [vmem:[#allocation8 + $0x68] sm:$0xf]
    %v246 = vld [vmem:[#allocation8 + $0x6c] sm:$0xf]
    %v247 = vld [vmem:[#allocation8 + $0x70] sm:$0xf]
    %v248 = vld [vmem:[#allocation8 + $0x74] sm:$0xf]
    %v249 = vld [vmem:[#allocation8 + $0x78] sm:$0xf]
    %v250 = vld [vmem:[#allocation8 + $0x7c] sm:$0xf]
    %v251 = vld [vmem:[%s6] sm:$0x3]
    %v252 = vld [vmem:[%s7] sm:$0x3]
    %v253 = vpack.c.bf16 %v218, %v218
    %v254 = vperm.slane %v251, 0
    %v271 = vunpack.c.l.b16 %v219
    %v272 = vunpack.c.l.b16 %v220
    %v273 = vunpack.c.l.b16 %v221
    %v274 = vunpack.c.l.b16 %v222
    %v275 = vunpack.c.l.b16 %v223
    %v276 = vunpack.c.l.b16 %v224
    %v277 = vunpack.c.l.b16 %v225
    %v278 = vunpack.c.l.b16 %v226
    %v279 = vunpack.c.l.b16 %v227
    %v280 = vunpack.c.l.b16 %v228
    %v281 = vunpack.c.l.b16 %v229
    %v282 = vunpack.c.l.b16 %v230
    %v283 = vunpack.c.l.b16 %v231
    %v284 = vunpack.c.l.b16 %v232
    %v285 = vunpack.c.l.b16 %v233
    %v286 = vunpack.c.l.b16 %v234
    %v287 = vpack.c.b16 %v272, %v271
    %v288 = vpack.c.b16 %v274, %v273
    %v289 = vpack.c.b16 %v276, %v275
    %v290 = vpack.c.b16 %v278, %v277
    %v291 = vpack.c.b16 %v280, %v279
    %v292 = vpack.c.b16 %v282, %v281
    %v293 = vpack.c.b16 %v284, %v283
    %v294 = vpack.c.b16 %v286, %v285
    %303 = vmatpush.bf16.msra.mxu0 %v294
    %304 = vmatpush.bf16.msra.mxu0 %v293
    %305 = vmatpush.bf16.msra.mxu0 %v292
    %306 = vmatpush.bf16.msra.mxu0 %v291
    %307 = vmatpush.bf16.msra.mxu0 %v290
    %308 = vmatpush.bf16.msra.mxu0 %v289
    %309 = vmatpush.bf16.msra.mxu0 %v288
    %310 = vmatpush.bf16.msra.mxu0 %v287
    %311 = vmatmul.bf16.gmra.mxu0 %v253
    %v312 = vpop.f32.mrf.mxu0
    %v313 = vadd.f32 %v254, %v312
    %v314 = vpop.f32.mrf.mxu0
    %315 = vdwg.mxu0
    %v316 = vmul.f32 %v313, 0.5
    %v317 = vmul.f32 %v313, 0.70710677
    %v318 = vmul.f32 %v317, %v317
    %v319 = vmin.f32 16.0, %v318
    %v320 = vmul.f32 %v319, 2.1237322e-06
    %v321 = vadd.f32 %v320, 0.00028619796
    %v322 = vmul.f32 %v319, %v321
    %v323 = vadd.f32 %v322, 0.0036580483
    %v324 = vmul.f32 %v319, %v323
    %v325 = vadd.f32 %v324, 0.05243302
    %v326 = vmul.f32 %v319, %v325
    %v327 = vadd.f32 %v326, 0.18741608
    %v328 = vmul.f32 %v319, %v327
    %v329 = vadd.f32 %v328, 1.1283791
    %v330 = vmul.f32 %v317, %v329
    %v331 = vmul.f32 %v319, 3.8918573e-05
    %v332 = vadd.f32 %v331, 0.001143296
    %v333 = vmul.f32 %v319, %v332
    %v334 = vadd.f32 %v333, 0.014752088
    %v335 = vmul.f32 %v319, %v334
    %v336 = vadd.f32 %v335, 0.112945676
    %v337 = vmul.f32 %v319, %v336
    %v338 = vadd.f32 %v337, 0.4994258
    %v339 = vmul.f32 %v319, %v338
    %v340 = vadd.f32 %v339, 1.0
    %v341 = vrcp.pop %v340
    %v342 = vmul.f32 %v340, %v341
    %v343 = vsub.f32 1.0, %v342
    %v344 = vmul.f32 %v341, %v343
    %v345 = vadd.f32 %v341, %v344
    %vm346 = vweird.f32 %v340
    %vm347 = vweird.f32 %v341
    %vm348 = vmor %vm346, %vm347
    %v349 = vsel %vm348, %v341, %v345
    %v350 = vand.u32 2147483647, %v340
    %vm351 = vcmp.eq.f32.partialorder %v350, 8.507059e+37
    %v352 = vand.u32 %v340, 2147483648
    %v353 = vor.u32 1.1754944e-38, %v352
    %v354 = vsel %vm351, %v353, %v349
    %v355 = vmul.f32 %v330, %v354
    %v356 = vmin.f32 %v355, 1.0
    %v357 = vmax.f32 %v356, -1.0
    %v358 = vadd.f32 %v357, 1.0
    %v359 = vmul.f32 %v316, %v358
    %v360 = vpack.c.bf16 %v359, %v359
    %v361 = vperm.slane %v251, 1
    %v378 = vunpack.c.l.b16 %v235
    %v379 = vunpack.c.l.b16 %v236
    %v380 = vunpack.c.l.b16 %v237
    %v381 = vunpack.c.l.b16 %v238
    %v382 = vunpack.c.l.b16 %v239
    %v383 = vunpack.c.l.b16 %v240
    %v384 = vunpack.c.l.b16 %v241
    %v385 = vunpack.c.l.b16 %v242
    %v386 = vunpack.c.l.b16 %v243
    %v387 = vunpack.c.l.b16 %v244
    %v388 = vunpack.c.l.b16 %v245
    %v389 = vunpack.c.l.b16 %v246
    %v390 = vunpack.c.l.b16 %v247
    %v391 = vunpack.c.l.b16 %v248
    %v392 = vunpack.c.l.b16 %v249
    %v393 = vunpack.c.l.b16 %v250
    %v394 = vpack.c.b16 %v379, %v378
    %v395 = vpack.c.b16 %v381, %v380
    %v396 = vpack.c.b16 %v383, %v382
    %v397 = vpack.c.b16 %v385, %v384
    %v398 = vpack.c.b16 %v387, %v386
    %v399 = vpack.c.b16 %v389, %v388
    %v400 = vpack.c.b16 %v391, %v390
    %v401 = vpack.c.b16 %v393, %v392
    %410 = vmatpush.bf16.msra.mxu0 %v401
    %411 = vmatpush.bf16.msra.mxu0 %v400
    %412 = vmatpush.bf16.msra.mxu0 %v399
    %413 = vmatpush.bf16.msra.mxu0 %v398
    %414 = vmatpush.bf16.msra.mxu0 %v397
    %415 = vmatpush.bf16.msra.mxu0 %v396
    %416 = vmatpush.bf16.msra.mxu0 %v395
    %417 = vmatpush.bf16.msra.mxu0 %v394
    %418 = vmatmul.bf16.gmra.mxu0 %v360
    %v419 = vpop.f32.mrf.mxu0
    %v420 = vadd.f32 %v361, %v419
    %v421 = vpop.f32.mrf.mxu0
    %422 = vdwg.mxu0
    %v423 = vmul.f32 %v420, 0.5
    %v424 = vmul.f32 %v420, 0.70710677
    %v425 = vmul.f32 %v424, %v424
    %v426 = vmin.f32 16.0, %v425
    %v427 = vmul.f32 %v426, 2.1237322e-06
    %v428 = vadd.f32 %v427, 0.00028619796
    %v429 = vmul.f32 %v426, %v428
    %v430 = vadd.f32 %v429, 0.0036580483
    %v431 = vmul.f32 %v426, %v430
    %v432 = vadd.f32 %v431, 0.05243302
    %v433 = vmul.f32 %v426, %v432
    %v434 = vadd.f32 %v433, 0.18741608
    %v435 = vmul.f32 %v426, %v434
    %v436 = vadd.f32 %v435, 1.1283791
    %v437 = vmul.f32 %v424, %v436
    %v438 = vmul.f32 %v426, 3.8918573e-05
    %v439 = vadd.f32 %v438, 0.001143296
    %v440 = vmul.f32 %v426, %v439
    %v441 = vadd.f32 %v440, 0.014752088
    %v442 = vmul.f32 %v426, %v441
    %v443 = vadd.f32 %v442, 0.112945676
    %v444 = vmul.f32 %v426, %v443
    %v445 = vadd.f32 %v444, 0.4994258
    %v446 = vmul.f32 %v426, %v445
    %v447 = vadd.f32 %v446, 1.0
    %v448 = vrcp.pop %v447
    %v449 = vmul.f32 %v447, %v448
    %v450 = vsub.f32 1.0, %v449
    %v451 = vmul.f32 %v448, %v450
    %v452 = vadd.f32 %v448, %v451
    %vm453 = vweird.f32 %v447
    %vm454 = vweird.f32 %v448
    %vm455 = vmor %vm453, %vm454
    %v456 = vsel %vm455, %v448, %v452
    %v457 = vand.u32 2147483647, %v447
    %vm458 = vcmp.eq.f32.partialorder %v457, 8.507059e+37
    %v459 = vand.u32 %v447, 2147483648
    %v460 = vor.u32 1.1754944e-38, %v459
    %v461 = vsel %vm458, %v460, %v456
    %v462 = vmul.f32 %v437, %v461
    %v463 = vmin.f32 %v462, 1.0
    %v464 = vmax.f32 %v463, -1.0
    %v465 = vadd.f32 %v464, 1.0
    %v466 = vmul.f32 %v423, %v465
    %v467 = vadd.f32 %v466, %v218
    %468 = vadd.xlane.f32.xlu0 %v467
    %v469 = vpop.xlane.xlu0 %468
    %v470 = vrcp.pop 128.0
    %v471 = vmul.f32 128.0, %v470
    %v472 = vsub.f32 1.0, %v471
    %v473 = vmul.f32 %v470, %v472
    %v474 = vadd.f32 %v470, %v473
    %vm475 = vweird.f32 %v470
    %v476 = vsel %vm475, %v470, %v474
    %v477 = vmul.f32 %v469, %v476
    %v478 = vsub.f32 %v467, %v477
    %v479 = vmul.f32 %v478, %v478
    %480 = vadd.xlane.f32.xlu0 %v479
    %v481 = vpop.xlane.xlu0 %480
    %v482 = vmul.f32 %v481, %v476
    %v483 = vadd.f32 %v482, 1e-05
    %v484 = vrsqrt.pop %v483
    %v485 = vmul.f32 %v484, %v483
    %v486 = vmul.f32 %v485, %v484
    %v487 = vmul.f32 0.5, %v486
    %v488 = vsub.f32 1.5, %v487
    %v489 = vmul.f32 %v484, %v488
    %vm490 = vweird.f32 %v483
    %vm491 = vweird.f32 %v484
    %vm492 = vmor %vm490, %vm491
    %v493 = vsel %vm492, %v484, %v489
    %v494 = vmul.f32 %v478, %v493
    %v495 = vperm.slane %v252, 0
    %v496 = vmul.f32 %v494, %v495
    %v497 = vperm.slane %v252, 1
    %v498 = vadd.f32 %v496, %v497
    %s499 = scalar_lea.vmem [#allocation8], 128
    %v500 = vld [vmem:[%s499] sm:$0xf]
    %v501 = vld [vmem:[%s499 + $0x4] sm:$0xf]
    %v502 = vld [vmem:[%s499 + $0x8] sm:$0xf]
    %v503 = vld [vmem:[%s499 + $0xc] sm:$0xf]
    %v504 = vld [vmem:[%s499 + $0x10] sm:$0xf]
    %v505 = vld [vmem:[%s499 + $0x14] sm:$0xf]
    %v506 = vld [vmem:[%s499 + $0x18] sm:$0xf]
    %v507 = vld [vmem:[%s499 + $0x1c] sm:$0xf]
    %v508 = vld [vmem:[%s499 + $0x20] sm:$0xf]
    %v509 = vld [vmem:[%s499 + $0x24] sm:$0xf]
    %v510 = vld [vmem:[%s499 + $0x28] sm:$0xf]
    %v511 = vld [vmem:[%s499 + $0x2c] sm:$0xf]
    %v512 = vld [vmem:[%s499 + $0x30] sm:$0xf]
    %v513 = vld [vmem:[%s499 + $0x34] sm:$0xf]
    %v514 = vld [vmem:[%s499 + $0x38] sm:$0xf]
    %v515 = vld [vmem:[%s499 + $0x3c] sm:$0xf]
    %v516 = vld [vmem:[%s499 + $0x40] sm:$0xf]
    %v517 = vld [vmem:[%s499 + $0x44] sm:$0xf]
    %v518 = vld [vmem:[%s499 + $0x48] sm:$0xf]
    %v519 = vld [vmem:[%s499 + $0x4c] sm:$0xf]
    %v520 = vld [vmem:[%s499 + $0x50] sm:$0xf]
    %v521 = vld [vmem:[%s499 + $0x54] sm:$0xf]
    %v522 = vld [vmem:[%s499 + $0x58] sm:$0xf]
    %v523 = vld [vmem:[%s499 + $0x5c] sm:$0xf]
    %v524 = vld [vmem:[%s499 + $0x60] sm:$0xf]
    %v525 = vld [vmem:[%s499 + $0x64] sm:$0xf]
    %v526 = vld [vmem:[%s499 + $0x68] sm:$0xf]
    %v527 = vld [vmem:[%s499 + $0x6c] sm:$0xf]
    %v528 = vld [vmem:[%s499 + $0x70] sm:$0xf]
    %v529 = vld [vmem:[%s499 + $0x74] sm:$0xf]
    %v530 = vld [vmem:[%s499 + $0x78] sm:$0xf]
    %v531 = vld [vmem:[%s499 + $0x7c] sm:$0xf]
    %s532 = scalar_lea.vmem %s6, 2
    %v533 = vld [vmem:[%s532] sm:$0x3]
    %s534 = scalar_lea.vmem %s7, 2
    %v535 = vld [vmem:[%s534] sm:$0x3]
    %v536 = vpack.c.bf16 %v498, %v498
    %v537 = vperm.slane %v533, 0
    %v554 = vunpack.c.l.b16 %v500
    %v555 = vunpack.c.l.b16 %v501
    %v556 = vunpack.c.l.b16 %v502
    %v557 = vunpack.c.l.b16 %v503
    %v558 = vunpack.c.l.b16 %v504
    %v559 = vunpack.c.l.b16 %v505
    %v560 = vunpack.c.l.b16 %v506
    %v561 = vunpack.c.l.b16 %v507
    %v562 = vunpack.c.l.b16 %v508
    %v563 = vunpack.c.l.b16 %v509
    %v564 = vunpack.c.l.b16 %v510
    %v565 = vunpack.c.l.b16 %v511
    %v566 = vunpack.c.l.b16 %v512
    %v567 = vunpack.c.l.b16 %v513
    %v568 = vunpack.c.l.b16 %v514
    %v569 = vunpack.c.l.b16 %v515
    %v570 = vpack.c.b16 %v555, %v554
    %v571 = vpack.c.b16 %v557, %v556
    %v572 = vpack.c.b16 %v559, %v558
    %v573 = vpack.c.b16 %v561, %v560
    %v574 = vpack.c.b16 %v563, %v562
    %v575 = vpack.c.b16 %v565, %v564
    %v576 = vpack.c.b16 %v567, %v566
    %v577 = vpack.c.b16 %v569, %v568
    %586 = vmatpush.bf16.msra.mxu0 %v577
    %587 = vmatpush.bf16.msra.mxu0 %v576
    %588 = vmatpush.bf16.msra.mxu0 %v575
    %589 = vmatpush.bf16.msra.mxu0 %v574
    %590 = vmatpush.bf16.msra.mxu0 %v573
    %591 = vmatpush.bf16.msra.mxu0 %v572
    %592 = vmatpush.bf16.msra.mxu0 %v571
    %593 = vmatpush.bf16.msra.mxu0 %v570
    %594 = vmatmul.bf16.gmra.mxu0 %v536
    %v595 = vpop.f32.mrf.mxu0
    %v596 = vadd.f32 %v537, %v595
    %v597 = vpop.f32.mrf.mxu0
    %598 = vdwg.mxu0
    %v599 = vmul.f32 %v596, 0.5
    %v600 = vmul.f32 %v596, 0.70710677
    %v601 = vmul.f32 %v600, %v600
    %v602 = vmin.f32 16.0, %v601
    %v603 = vmul.f32 %v602, 2.1237322e-06
    %v604 = vadd.f32 %v603, 0.00028619796
    %v605 = vmul.f32 %v602, %v604
    %v606 = vadd.f32 %v605, 0.0036580483
    %v607 = vmul.f32 %v602, %v606
    %v608 = vadd.f32 %v607, 0.05243302
    %v609 = vmul.f32 %v602, %v608
    %v610 = vadd.f32 %v609, 0.18741608
    %v611 = vmul.f32 %v602, %v610
    %v612 = vadd.f32 %v611, 1.1283791
    %v613 = vmul.f32 %v600, %v612
    %v614 = vmul.f32 %v602, 3.8918573e-05
    %v615 = vadd.f32 %v614, 0.001143296
    %v616 = vmul.f32 %v602, %v615
    %v617 = vadd.f32 %v616, 0.014752088
    %v618 = vmul.f32 %v602, %v617
    %v619 = vadd.f32 %v618, 0.112945676
    %v620 = vmul.f32 %v602, %v619
    %v621 = vadd.f32 %v620, 0.4994258
    %v622 = vmul.f32 %v602, %v621
    %v623 = vadd.f32 %v622, 1.0
    %v624 = vrcp.pop %v623
    %v625 = vmul.f32 %v623, %v624
    %v626 = vsub.f32 1.0, %v625
    %v627 = vmul.f32 %v624, %v626
    %v628 = vadd.f32 %v624, %v627
    %vm629 = vweird.f32 %v623
    %vm630 = vweird.f32 %v624
    %vm631 = vmor %vm629, %vm630
    %v632 = vsel %vm631, %v624, %v628
    %v633 = vand.u32 2147483647, %v623
    %vm634 = vcmp.eq.f32.partialorder %v633, 8.507059e+37
    %v635 = vand.u32 %v623, 2147483648
    %v636 = vor.u32 1.1754944e-38, %v635
    %v637 = vsel %vm634, %v636, %v632
    %v638 = vmul.f32 %v613, %v637
    %v639 = vmin.f32 %v638, 1.0
    %v640 = vmax.f32 %v639, -1.0
    %v641 = vadd.f32 %v640, 1.0
    %v642 = vmul.f32 %v599, %v641
    %v643 = vpack.c.bf16 %v642, %v642
    %v644 = vperm.slane %v533, 1
    %v661 = vunpack.c.l.b16 %v516
    %v662 = vunpack.c.l.b16 %v517
    %v663 = vunpack.c.l.b16 %v518
    %v664 = vunpack.c.l.b16 %v519
    %v665 = vunpack.c.l.b16 %v520
    %v666 = vunpack.c.l.b16 %v521
    %v667 = vunpack.c.l.b16 %v522
    %v668 = vunpack.c.l.b16 %v523
    %v669 = vunpack.c.l.b16 %v524
    %v670 = vunpack.c.l.b16 %v525
    %v671 = vunpack.c.l.b16 %v526
    %v672 = vunpack.c.l.b16 %v527
    %v673 = vunpack.c.l.b16 %v528
    %v674 = vunpack.c.l.b16 %v529
    %v675 = vunpack.c.l.b16 %v530
    %v676 = vunpack.c.l.b16 %v531
    %v677 = vpack.c.b16 %v662, %v661
    %v678 = vpack.c.b16 %v664, %v663
    %v679 = vpack.c.b16 %v666, %v665
    %v680 = vpack.c.b16 %v668, %v667
    %v681 = vpack.c.b16 %v670, %v669
    %v682 = vpack.c.b16 %v672, %v671
    %v683 = vpack.c.b16 %v674, %v673
    %v684 = vpack.c.b16 %v676, %v675
    %693 = vmatpush.bf16.msra.mxu0 %v684
    %694 = vmatpush.bf16.msra.mxu0 %v683
    %695 = vmatpush.bf16.msra.mxu0 %v682
    %696 = vmatpush.bf16.msra.mxu0 %v681
    %697 = vmatpush.bf16.msra.mxu0 %v680
    %698 = vmatpush.bf16.msra.mxu0 %v679
    %699 = vmatpush.bf16.msra.mxu0 %v678
    %700 = vmatpush.bf16.msra.mxu0 %v677
    %701 = vmatmul.bf16.gmra.mxu0 %v643
    %v702 = vpop.f32.mrf.mxu0
    %v703 = vadd.f32 %v644, %v702
    %v704 = vpop.f32.mrf.mxu0
    %705 = vdwg.mxu0
    %v706 = vmul.f32 %v703, 0.5
    %v707 = vmul.f32 %v703, 0.70710677
    %v708 = vmul.f32 %v707, %v707
    %v709 = vmin.f32 16.0, %v708
    %v710 = vmul.f32 %v709, 2.1237322e-06
    %v711 = vadd.f32 %v710, 0.00028619796
    %v712 = vmul.f32 %v709, %v711
    %v713 = vadd.f32 %v712, 0.0036580483
    %v714 = vmul.f32 %v709, %v713
    %v715 = vadd.f32 %v714, 0.05243302
    %v716 = vmul.f32 %v709, %v715
    %v717 = vadd.f32 %v716, 0.18741608
    %v718 = vmul.f32 %v709, %v717
    %v719 = vadd.f32 %v718, 1.1283791
    %v720 = vmul.f32 %v707, %v719
    %v721 = vmul.f32 %v709, 3.8918573e-05
    %v722 = vadd.f32 %v721, 0.001143296
    %v723 = vmul.f32 %v709, %v722
    %v724 = vadd.f32 %v723, 0.014752088
    %v725 = vmul.f32 %v709, %v724
    %v726 = vadd.f32 %v725, 0.112945676
    %v727 = vmul.f32 %v709, %v726
    %v728 = vadd.f32 %v727, 0.4994258
    %v729 = vmul.f32 %v709, %v728
    %v730 = vadd.f32 %v729, 1.0
    %v731 = vrcp.pop %v730
    %v732 = vmul.f32 %v730, %v731
    %v733 = vsub.f32 1.0, %v732
    %v734 = vmul.f32 %v731, %v733
    %v735 = vadd.f32 %v731, %v734
    %vm736 = vweird.f32 %v730
    %vm737 = vweird.f32 %v731
    %vm738 = vmor %vm736, %vm737
    %v739 = vsel %vm738, %v731, %v735
    %v740 = vand.u32 2147483647, %v730
    %vm741 = vcmp.eq.f32.partialorder %v740, 8.507059e+37
    %v742 = vand.u32 %v730, 2147483648
    %v743 = vor.u32 1.1754944e-38, %v742
    %v744 = vsel %vm741, %v743, %v739
    %v745 = vmul.f32 %v720, %v744
    %v746 = vmin.f32 %v745, 1.0
    %v747 = vmax.f32 %v746, -1.0
    %v748 = vadd.f32 %v747, 1.0
    %v749 = vmul.f32 %v706, %v748
    %v750 = vadd.f32 %v749, %v498
    %751 = vadd.xlane.f32.xlu0 %v750
    %v752 = vpop.xlane.xlu0 %751
    %v753 = vmul.f32 %v752, %v476
    %v754 = vsub.f32 %v750, %v753
    %v755 = vmul.f32 %v754, %v754
    %756 = vadd.xlane.f32.xlu0 %v755
    %v757 = vpop.xlane.xlu0 %756
    %v758 = vmul.f32 %v757, %v476
    %v759 = vadd.f32 %v758, 1e-05
    %v760 = vrsqrt.pop %v759
    %v761 = vmul.f32 %v760, %v759
    %v762 = vmul.f32 %v761, %v760
    %v763 = vmul.f32 0.5, %v762
    %v764 = vsub.f32 1.5, %v763
    %v765 = vmul.f32 %v760, %v764
    %vm766 = vweird.f32 %v759
    %vm767 = vweird.f32 %v760
    %vm768 = vmor %vm766, %vm767
    %v769 = vsel %vm768, %v760, %v765
    %v770 = vmul.f32 %v754, %v769
    %v771 = vperm.slane %v535, 0
    %v772 = vmul.f32 %v770, %v771
    %v773 = vperm.slane %v535, 1
    %v774 = vadd.f32 %v772, %v773
    %v775 = vpack.c.bf16 %v774, %v774
    %v776 = vld [vmem:[#allocation10] sm:$0xf]
    %v777 = vld [vmem:[#allocation10 + $0x4] sm:$0xf]
    %v778 = vld [vmem:[#allocation10 + $0x8] sm:$0xf]
    %v779 = vld [vmem:[#allocation10 + $0xc] sm:$0xf]
    %v780 = vld [vmem:[#allocation10 + $0x10] sm:$0xf]
    %v781 = vld [vmem:[#allocation10 + $0x14] sm:$0xf]
    %v782 = vld [vmem:[#allocation10 + $0x18] sm:$0xf]
    %v783 = vld [vmem:[#allocation10 + $0x1c] sm:$0xf]
    %v784 = vld [vmem:[#allocation10 + $0x20] sm:$0xf]
    %v785 = vld [vmem:[#allocation10 + $0x24] sm:$0xf]
    %v786 = vld [vmem:[#allocation10 + $0x28] sm:$0xf]
    %v787 = vld [vmem:[#allocation10 + $0x2c] sm:$0xf]
    %v788 = vld [vmem:[#allocation10 + $0x30] sm:$0xf]
    %v789 = vld [vmem:[#allocation10 + $0x34] sm:$0xf]
    %v790 = vld [vmem:[#allocation10 + $0x38] sm:$0xf]
    %v791 = vld [vmem:[#allocation10 + $0x3c] sm:$0xf]
    %v792 = vld [vmem:[%s9] sm:$0x1]
    %v794 = vperm.slane %v792, 0
    %v812 = vunpack.c.l.b16 %v776
    %v813 = vunpack.c.l.b16 %v777
    %v814 = vunpack.c.l.b16 %v778
    %v815 = vunpack.c.l.b16 %v779
    %v816 = vunpack.c.l.b16 %v780
    %v817 = vunpack.c.l.b16 %v781
    %v818 = vunpack.c.l.b16 %v782
    %v819 = vunpack.c.l.b16 %v783
    %v820 = vunpack.c.l.b16 %v784
    %v821 = vunpack.c.l.b16 %v785
    %v822 = vunpack.c.l.b16 %v786
    %v823 = vunpack.c.l.b16 %v787
    %v824 = vunpack.c.l.b16 %v788
    %v825 = vunpack.c.l.b16 %v789
    %v826 = vunpack.c.l.b16 %v790
    %v827 = vunpack.c.l.b16 %v791
    %v828 = vpack.c.b16 %v813, %v812
    %v829 = vpack.c.b16 %v815, %v814
    %v830 = vpack.c.b16 %v817, %v816
    %v831 = vpack.c.b16 %v819, %v818
    %v832 = vpack.c.b16 %v821, %v820
    %v833 = vpack.c.b16 %v823, %v822
    %v834 = vpack.c.b16 %v825, %v824
    %v835 = vpack.c.b16 %v827, %v826
    %844 = vmatpush.bf16.msra.mxu0 %v835
    %845 = vmatpush.bf16.msra.mxu0 %v834
    %846 = vmatpush.bf16.msra.mxu0 %v833
    %847 = vmatpush.bf16.msra.mxu0 %v832
    %848 = vmatpush.bf16.msra.mxu0 %v831
    %849 = vmatpush.bf16.msra.mxu0 %v830
    %850 = vmatpush.bf16.msra.mxu0 %v829
    %851 = vmatpush.bf16.msra.mxu0 %v828
    %852 = vmatmul.bf16.gmra.mxu0 %v775
    %v853 = vpop.f32.mrf.mxu0
    %v854 = vadd.f32 %v794, %v853
    %v855 = vpop.f32.mrf.mxu0
    %856 = vdwg.mxu0
    %857 = vst [vmem:[#allocation11] sm:$0xff] %v854
    // Predicated region
    $region62: #{tpu_custom_call.1} parent=1 // pred_check
      _
    $region63: #{tpu_custom_call.1} parent=1 // pred_check_branch
      %859 = sbr.rel (0) target = $region65
    $region64: #{tpu_custom_call.1} parent=1 // pred_region
      %861 = vsyncadd [#allocation4], 0
      %s863 = sshll.u32 [#allocation11], 4
      %s864 = int_to_ptr.vmem [resolvable:$true] %s863
      %s865 = sshll.u32 %s10, 4
      %s866 = int_to_ptr.hbm [resolvable:$true] %s865
      %868 = dma.vmem_to_hbm [thread:$0]  %s864, 128, %s866, [#allocation4]
    $region65: #{tpu_custom_call.1} parent=1 // pred_fallthru
      _
    // Predicated region
    $region66: #{tpu_custom_call.1} parent=1 // pred_check
      _
    $region67: #{tpu_custom_call.1} parent=1 // pred_check_branch
      %870 = sbr.rel (0) target = $region69
    $region68: #{tpu_custom_call.1} parent=1 // pred_region
      %872 = dma.done [#allocation4], 128
    $region69: #{tpu_custom_call.1} parent=1 // pred_fallthru
      _
    %873 = vsyncpa [#allocation3], 1
    %874 = vsyncpa [#allocation6], 1
    %875 = vsyncpa [#allocation9], 1
    %876 = vsyncpa [#allocation4], 1

</llo_original>
